<compile_context>
chip_gen: v5e
topology: v5e:2x2
jax: 0.10.0
libtpu: 0.0.40
codegen_flags: <defaults>
</compile_context>

<pallas_src>
import math

import jax
import jax.numpy as jnp
from jax import lax
from jax.experimental import pallas as pl
from jax.experimental.pallas import tpu as pltpu


# ----------------------------- config ---------------------------------------
CFG = {
    "num_views": 3,
    "feat_dim": 32,
    "hidden_dim": 32,
    "refine_steps": 3,       # cfg.refinement.num_steps
    "refine_alpha": 0.5,     # cfg.refinement.alpha
    "num_corr": 32,          # cfg.correspondence.num_corr
    "confidence_min": 0.1,
    "sync_algorithm": "adjacent",
    "use_gt_Rt": False,
    "w_pairwise": 1.0,       # cfg.loss.weights.pairwise
    "w_sync": 1.0,           # cfg.loss.weights.sync
    "loss_type": "rmse",
}

# MXU operands (feature MLP + similarity matmul) are bf16 (native MXU path on
# v5e/v6e/v7x, halves operand VMEM/DMA); all element-wise / reduction math
# (min/argmin/ratio, rsqrt) stays in f32 (v5e VPU/EUP have no bf16).
SIM_MXU_DTYPE = jnp.bfloat16
_VMEM_LIMIT = 32 * 1024 * 1024
# NOTE: plain Python floats (NOT jnp arrays) so the kernels never close over a
# concrete jax constant (that was the previous "captures constants" failure).
_BIG = 1e30              # top-2 running-accumulator init
_PAD_KEY_DIST = 1e8      # distance of sentinel (padded) keys to every query
_SUB = 128               # inner 128x128 (keys x queries) sub-tile
_TQ_CAP = 512            # resident query block cap
_TK_CAP = 512            # streamed key block cap


def _round_up(x, m):
    return -(-x // m) * m


# ----------------------- Pallas kernel 1: feature MLP -----------------------
def _feat_kernel(x_ref, w1_ref, b1_ref, w2_ref, b2_ref, g_ref, o_ref):
    # x: (TILE, PACK*CIN) bf16; all weights are block-diagonal packed so PACK
    # pixels are processed per row and every lane of the 128-wide output is used.
    x = x_ref[...]
    h = jnp.dot(x, w1_ref[...], preferred_element_type=jnp.float32) + b1_ref[...]
    h = jnp.maximum(h, 0.0)
    f = jnp.dot(h.astype(jnp.bfloat16), w2_ref[...],
                preferred_element_type=jnp.float32) + b2_ref[...]
    # per-pixel (per 32-lane group) squared norm, broadcast back to every lane
    # of its group with one small bf16 MXU matmul against the group-sum matrix.
    ff = (f * f).astype(jnp.bfloat16)
    ss = jnp.dot(ff, g_ref[...], preferred_element_type=jnp.float32)
    o_ref[...] = f * lax.rsqrt(ss + 1e-8)                       # L2-normalized f32


def _pack_mlp_params(w1, b1, w2, b2, pack):
    f_dim = w2.shape[1]
    eye = jnp.eye(pack, dtype=jnp.float32)
    w1p = jnp.kron(eye, w1).astype(SIM_MXU_DTYPE)   # (PACK*CIN, PACK*HID) block-diag
    w2p = jnp.kron(eye, w2).astype(SIM_MXU_DTYPE)   # (PACK*HID, PACK*F)   block-diag
    b1p = jnp.tile(jnp.reshape(b1, (1, -1)), (1, pack)).astype(jnp.float32)
    b2p = jnp.tile(jnp.reshape(b2, (1, -1)), (1, pack)).astype(jnp.float32)
    # group-sum matrix: broadcasts each packed pixel's squared norm across its
    # own F-lane group (used for the per-pixel L2 normalization).  0/1 exact in bf16.
    gsum = jnp.kron(eye, jnp.ones((f_dim, f_dim), jnp.float32)).astype(SIM_MXU_DTYPE)
    return w1p, b1p, w2p, b2p, gsum


def extract_features(pix, params, row_tile=2048):
    """pix: (P, CIN) float -> (P, F) L2-normalized features (lane-dense MLP)."""
    w1, b1, w2, b2 = params
    p_rows, cin = pix.shape
    f_dim = w2.shape[1]
    pack = 128 // f_dim if (f_dim <= 128 and 128 % f_dim == 0) else 1
    w1p, b1p, w2p, b2p, gsum = _pack_mlp_params(w1, b1, w2, b2, pack)

    pix = pix.astype(SIM_MXU_DTYPE)               # bf16 operands (fused with transpose)
    rows = -(-p_rows // pack)                     # packed row count
    tile = min(row_tile, rows)                    # large tiles: amortize grid overhead
    # v7x megacore: make sure the parallel grid axis has >= 2 blocks.
    if rows > 8 and tile >= rows:
        tile = _round_up(-(-rows // 2), 8)
    rows_pad = _round_up(rows, tile)
    pad = rows_pad * pack - p_rows
    if pad:
        pix = jnp.concatenate([pix, jnp.zeros((pad, cin), pix.dtype)], axis=0)
    xp = pix.reshape(rows_pad, pack * cin)        # free row-major repack

    out = pl.pallas_call(
        _feat_kernel,
        out_shape=jax.ShapeDtypeStruct((rows_pad, pack * f_dim), jnp.float32),
        grid=(rows_pad // tile,),
        in_specs=[
            pl.BlockSpec((tile, pack * cin), lambda i: (i, 0)),
            pl.BlockSpec(w1p.shape, lambda i: (0, 0)),
            pl.BlockSpec(b1p.shape, lambda i: (0, 0)),
            pl.BlockSpec(w2p.shape, lambda i: (0, 0)),
            pl.BlockSpec(b2p.shape, lambda i: (0, 0)),
            pl.BlockSpec(gsum.shape, lambda i: (0, 0)),
        ],
        out_specs=pl.BlockSpec((tile, pack * f_dim), lambda i: (i, 0)),
        compiler_params=pltpu.CompilerParams(
            dimension_semantics=("parallel",),
            vmem_limit_bytes=_VMEM_LIMIT),
    )(xp, w1p, b1p, w2p, b2p, gsum)
    return out.reshape(rows_pad * pack, f_dim)[:p_rows]          # free repack back


# ----------- Pallas kernel 2: streaming NxN matching + top-2 stats ----------
def _corr_topk_kernel(pi_ref, pj_ref, aq_ref, ak_ref, d1_ref, d2_ref, idx_ref):
    # pi/pj: SMEM pair->view tables (only used by the index_maps).
    del pi_ref, pj_ref
    ki = pl.program_id(3)
    tq = d1_ref.shape[-1]            # resident query block
    tk = ak_ref.shape[2]             # streamed key block
    nq_sub = tq // _SUB
    nk_sub = tk // _SUB

    @pl.when(ki == 0)
    def _init():
        d1_ref[...] = jnp.full_like(d1_ref, _BIG)
        d2_ref[...] = jnp.full_like(d2_ref, _BIG)
        idx_ref[...] = jnp.zeros_like(idx_ref)

    key_base = (ki * tk).astype(jnp.float32)

    # Sweep all (128 keys x 128 queries) sub-tiles of this block pair in ONE
    # grid step; top-2 accumulators for each query sub-tile are carried in
    # vregs across the (unrolled) key loop and written back once.
    for qs in range(nq_sub):                                     # static loop
        aq = aq_ref[0, 0, pl.ds(qs * _SUB, _SUB), :]             # (128, D) bf16
        qsl = pl.ds(qs * _SUB, _SUB)
        carry0 = (d1_ref[0, 0, :, qsl], d2_ref[0, 0, :, qsl], idx_ref[0, 0, :, qsl])

        def body(ks, carry, aq=aq):
            d1, d2, i1 = carry
            off = pl.multiple_of(ks * _SUB, _SUB)
            ak = ak_ref[0, 0, pl.ds(off, _SUB), :]               # (128, D) bf16
            # Distance tile (validity + geometry fully folded into the augmented
            # inner product), *transposed*: rows = keys (reduced axis), columns
            # = queries -> lane-dense per-query outputs.
            dist = lax.dot_general(ak, aq, (((1,), (1,)), ((), ())),
                                   preferred_element_type=jnp.float32)  # (128,128)
            row = lax.broadcasted_iota(jnp.float32, dist.shape, 0)       # local key idx
            t_m1 = jnp.min(dist, axis=0, keepdims=True)                  # (1, 128)
            t_i1 = jnp.min(jnp.where(dist <= t_m1, row, _BIG), axis=0, keepdims=True)
            # second-best within the tile, excluding only the tile argmin position
            t_m2 = jnp.min(jnp.where(row == t_i1, _BIG, dist), axis=0, keepdims=True)
            t_i1 = t_i1 + key_base + (ks * _SUB).astype(jnp.float32)     # global idx
            d1n = jnp.minimum(d1, t_m1)
            d2n = jnp.minimum(jnp.maximum(d1, t_m1), jnp.minimum(d2, t_m2))
            i1n = jnp.where(t_m1 < d1, t_i1, i1)
            return d1n, d2n, i1n

        d1, d2, i1 = lax.fori_loop(0, nk_sub, body, carry0, unroll=True)
        d1_ref[0, 0, :, qsl] = d1
        d2_ref[0, 0, :, qsl] = d2
        idx_ref[0, 0, :, qsl] = i1


def _pick_tile(n, cap):
    """Largest multiple-of-128 divisor of n (n % 128 == 0) that is <= cap."""
    best, t = 128, 128
    while t <= min(cap, n):
        if n % t == 0:
            best = t
        t += 128
    return best


def corr_nn_stats(a_q, a_k, pair_i, pair_j):
    """Streaming nearest / 2nd-nearest neighbor statistics over keys per query.

    a_q, a_k: (B, V, N_pad, D_pad) bf16; pair_i/pair_j: (P,) int32 view tables.
    Returns d1, d2 (f32) and nn_idx (int32), each (P, B, N_pad).
    """
    b, v, n, d = a_q.shape
    p_num = pair_i.shape[0]
    tq = _pick_tile(n, _TQ_CAP)
    tk = _pick_tile(n, _TK_CAP)
    grid = (p_num, b, n // tq, n // tk)

    def qmap(p, bi, qi, ki, pi, pj):
        return (bi, pi[p], qi, 0)

    def kmap(p, bi, qi, ki, pi, pj):
        return (bi, pj[p], ki, 0)

    def omap(p, bi, qi, ki, pi, pj):
        return (p, bi, 0, qi)

    d1, d2, idx = pl.pallas_call(
        _corr_topk_kernel,
        out_shape=tuple(jax.ShapeDtypeStruct((p_num, b, 1, n), jnp.float32)
                        for _ in range(3)),
        grid_spec=pltpu.PrefetchScalarGridSpec(
            num_scalar_prefetch=2,
            grid=grid,
            in_specs=[
                pl.BlockSpec((1, 1, tq, d), qmap),
                pl.BlockSpec((1, 1, tk, d), kmap),
            ],
            out_specs=tuple(pl.BlockSpec((1, 1, 1, tq), omap) for _ in range(3)),
        ),
        compiler_params=pltpu.CompilerParams(
            dimension_semantics=("parallel", "parallel", "parallel", "arbitrary"),
            vmem_limit_bytes=_VMEM_LIMIT),
    )(pair_i, pair_j, a_q, a_k)
    return d1[:, :, 0], d2[:, :, 0], idx[:, :, 0].astype(jnp.int32)


def build_matching_embeddings(feats, xyz, valid, alpha, n_pad):
    """Fold validity weights + geometry into one augmented inner product.

        dist(q,k) = (1-a)*(2 - 2*v_q*v_k*<f_q,f_k>)
                  + a*(|x_q|^2 + |x_k|^2 - 2<x_q,x_k>)
                  = <A_q(q), A_k(k)>                 (single MXU matmul / tile)

        A_q = [ s1*v*f,    s2*x,    a*|x|^2,  1 ]               s1 = sqrt(1-a)
        A_k = [-2*s1*v*f, -2*s2*x,  1,        a*|x|^2+2(1-a) ]  s2 = sqrt(a)

    Padded (sentinel) keys carry a large constant in the last column so their
    distance to every real query is ~1e8 (never selected).  The embedding dim
    is zero-padded to a multiple of 64 so the streamed bf16 rows are 128-byte
    contiguous DMA runs instead of 74-byte masked chunks.
    """
    a = float(alpha)
    s1 = math.sqrt(max(1.0 - a, 0.0))
    s2 = math.sqrt(max(a, 0.0))
    fw = (s1 * valid) * feats                    # validity folded into features
    xw = s2 * xyz
    xsq = jnp.sum(xyz * xyz, axis=-1, keepdims=True)
    ones = jnp.ones_like(xsq)
    a_q = jnp.concatenate([fw, xw, a * xsq, ones], axis=-1)
    a_k = jnp.concatenate([-2.0 * fw, -2.0 * xw, ones,
                           a * xsq + 2.0 * (1.0 - a)], axis=-1)
    b, v, n, d = a_q.shape
    if n_pad > n:                                # N padding (sentinel keys)
        pad_q = jnp.zeros((b, v, n_pad - n, d), a_q.dtype)
        pad_k = jnp.zeros((b, v, n_pad - n, d), a_k.dtype).at[..., d - 1].set(_PAD_KEY_DIST)
        a_q = jnp.concatenate([a_q, pad_q], axis=2)
        a_k = jnp.concatenate([a_k, pad_k], axis=2)
    d_pad = _round_up(d, 64)                     # lane-friendly embedding dim
    if d_pad > d:
        a_q = jnp.pad(a_q, ((0, 0), (0, 0), (0, 0), (0, d_pad - d)))
        a_k = jnp.pad(a_k, ((0, 0), (0, 0), (0, 0), (0, d_pad - d)))
    return a_q.astype(SIM_MXU_DTYPE), a_k.astype(SIM_MXU_DTYPE)


def partial_top_k(w, k, chunk=128):
    """Exact top-k: per-chunk top-k then global top-k over the candidates."""
    n = w.shape[-1]
    if (n % chunk) or (k > chunk) or ((n // chunk) * k >= n):
        return lax.top_k(w, k)                   # small-N fallback (still exact)
    r = n // chunk
    wv = w.reshape(w.shape[0], r, chunk)
    v_c, i_c = lax.top_k(wv, k)                                  # (BP, r, k)
    i_c = i_c + (jnp.arange(r, dtype=jnp.int32) * chunk)[None, :, None]
    v, meta = lax.top_k(v_c.reshape(w.shape[0], r * k), k)
    idx = jnp.take_along_axis(i_c.reshape(w.shape[0], r * k), meta, axis=1)
    return v, idx


def extract_pairwise_correspondences(feats, xyz, valid, ijs, num_corr, alpha):
    """All pairwise correspondences in ONE pallas_call.

    Pairs are folded into the grid with a scalar-prefetch pair->view table, so
    the per-view embeddings are built once (no per-pair HBM copies).
    """
    b, _, n, _ = feats.shape
    n_pad = _round_up(n, 128)
    a_q, a_k = build_matching_embeddings(feats, xyz, valid, alpha, n_pad)
    pair_i = jnp.asarray([i for (i, _) in ijs], jnp.int32)
    pair_j = jnp.asarray([j for (_, j) in ijs], jnp.int32)
    d1, d2, nn_idx = corr_nn_stats(a_q, a_k, pair_i, pair_j)     # (P, B, n_pad)
    p_num = len(ijs)
    d1 = d1[:, :, :n].reshape(p_num * b, n)
    d2 = d2[:, :, :n].reshape(p_num * b, n)
    nn_idx = jnp.minimum(nn_idx[:, :, :n].reshape(p_num * b, n), n - 1)
    # Lowe-style ratio-test weight (higher = more unique)
    w = jnp.clip(1.0 - d1 / jnp.maximum(d2, 1e-9), 0.0, 1.0)
    # TODO(synk): top-k correspondence selection has no clean Pallas equivalent;
    # done with an exact two-stage partial top-k (avoids a full sort over N).
    w_top, id_i = partial_top_k(w, num_corr)
    id_j = jnp.take_along_axis(nn_idx, id_i, axis=1)
    corr = {}
    for p, (i, j) in enumerate(ijs):
        sl = slice(p * b, (p + 1) * b)
        corr[(i, j)] = (id_i[sl], id_j[sl], w_top[sl])
    return corr


# ----------------------------- geometry glue ---------------------------------
def nn_gather(x, idx):
    return jnp.take_along_axis(x, idx[..., None], axis=1)


def transform_points_Rt(p, Rt, inverse=False):
    R = Rt[..., :3, :3]
    t = Rt[..., :3, 3]
    if inverse:
        return jnp.einsum("...ji,...nj->...ni", R, p - t[..., None, :])
    return jnp.einsum("...ij,...nj->...ni", R, p) + t[..., None, :]


def invert_Rt(Rt):
    R = Rt[..., :3, :3]
    t = Rt[..., :3, 3]
    Rin = jnp.swapaxes(R, -1, -2)
    tin = -jnp.einsum("...ij,...j->...i", Rin, t)
    out = jnp.zeros_like(Rt)
    out = out.at[..., :3, :3].set(Rin).at[..., :3, 3].set(tin)
    out = out.at[..., 3, 3].set(1.0)
    return out


def align_cpa(corr_i, corr_j, w):
    """Weighted Umeyama / Kabsch alignment i -> j. Returns (B, 4, 4)."""
    B = corr_i.shape[0]
    wn = w / jnp.maximum(jnp.sum(w, axis=-1, keepdims=True), 1e-9)
    mu_i = jnp.sum(wn[..., None] * corr_i, axis=1)
    mu_j = jnp.sum(wn[..., None] * corr_j, axis=1)
    ci = corr_i - mu_i[:, None]
    cj = corr_j - mu_j[:, None]
    H = jnp.einsum("bk,bki,bkj->bij", wn, ci, cj)                   # (B, 3, 3)
    # TODO(synk): 3x3 SVD (Umeyama) has no Pallas equivalent; kept in plain JAX.
    U, _, Vt = jnp.linalg.svd(H)
    V = jnp.swapaxes(Vt, -1, -2)
    Ut = jnp.swapaxes(U, -1, -2)
    det = jnp.linalg.det(jnp.matmul(V, Ut))
    ones = jnp.ones_like(det)
    D = jnp.eye(3, dtype=H.dtype)[None] * jnp.stack([ones, ones, det], -1)[:, None, :]
    R = jnp.matmul(jnp.matmul(V, D), Ut)
    t = mu_j - jnp.einsum("bij,bj->bi", R, mu_i)
    Rt = jnp.zeros((B, 4, 4), dtype=R.dtype)
    Rt = Rt.at[:, :3, :3].set(R).at[:, :3, 3].set(t).at[:, 3, 3].set(1.0)
    return Rt


def camera_chaining(pw_Rts, pw_conf, num_views, batch):
    del pw_conf  # chaining ignores confidences
    abs_list = [jnp.broadcast_to(jnp.eye(4, dtype=jnp.float32), (batch, 4, 4))]
    for k in range(1, num_views):
        abs_list.append(jnp.matmul(pw_Rts[(k - 1, k)], abs_list[-1]))
    return jnp.stack(abs_list, axis=1)                              # (B, V, 4, 4)


def get_corr_loss(xyz_cam, corr, conf, cfg, pw_Rts=None, abs_Rts=None):
    assert (pw_Rts is None) ^ (abs_Rts is None)
    out = {}
    for (i, j), (id_i, id_j, w_ij) in corr.items():
        ci = nn_gather(xyz_cam[:, i], id_i)
        cj = nn_gather(xyz_cam[:, j], id_j)
        if pw_Rts is None:
            Rt_ij = jnp.matmul(abs_Rts[:, j], invert_Rt(abs_Rts[:, i]))
        else:
            Rt_ij = pw_Rts[(i, j)]
        ci_t = transform_points_Rt(ci, Rt_ij)
        w_n = w_ij / jnp.maximum(jnp.sum(jnp.abs(w_ij), axis=-1, keepdims=True), 1e-12)
        corr_diff = jnp.sqrt(jnp.sum((ci_t - cj) ** 2, axis=-1) + 1e-12)  # rmse
        out[(i, j)] = jnp.sum(w_n * corr_diff, axis=-1)             # (B,)
    return out


# ----------------------------- full forward ---------------------------------
def syncmatch_forward(rgbs, K, deps, params, cfg):
    B = rgbs[0].shape[0]
    V = len(rgbs)
    _, C, H, W = rgbs[0].shape
    N = H * W
    Fdim = cfg["feat_dim"]

    # ---- MultiviewScreen: per-pixel feature MLP (Pallas) + backprojection ----
    rgb = jnp.stack(rgbs, axis=1)                                   # (B, V, 3, H, W)
    # TODO(synk): NCHW->pixel-major transpose still done in XLA; could be folded
    # into a weights-stationary (F, N) formulation of the feature kernel.
    pix = jnp.transpose(rgb, (0, 1, 3, 4, 2)).reshape(B * V * N, C)
    feats = extract_features(pix, params).reshape(B, V, N, Fdim)

    dep = jnp.stack(deps, axis=1)[:, :, 0]                          # (B, V, H, W)
    z = dep.reshape(B, V, N)
    uu, vv = jnp.meshgrid(jnp.arange(W, dtype=jnp.float32),
                          jnp.arange(H, dtype=jnp.float32), indexing="xy")
    u = uu.reshape(-1)
    v = vv.reshape(-1)
    fx, fy = K[:, 0, 0], K[:, 1, 1]
    cx, cy = K[:, 0, 2], K[:, 1, 2]
    X = (u[None, None] - cx[:, None, None]) / fx[:, None, None] * z
    Y = (v[None, None] - cy[:, None, None]) / fy[:, None, None] * z
    xyz_cam = jnp.stack([X, Y, z], axis=-1)                         # (B, V, N, 3)
    uv_screen = jnp.broadcast_to(jnp.stack([u, v], -1)[None, None], (B, V, N, 2))
    xyz_world = xyz_cam

    output = {"pc_feats": feats, "pc_xyz": xyz_world, "pc_uv": uv_screen}
    losses = []
    IJs = [(i, j) for i in range(V) for j in range(i + 1, V)]
    # matches reference clamp(min=1e-6) on the 0/1 validity mask
    valid = jnp.clip((xyz_cam[:, :, :, 2:3] > 0).astype(jnp.float32), 1e-6, None)

    num_steps = cfg["refine_steps"]
    for step_i in range(num_steps):
        alpha = cfg["refine_alpha"]
        if V > 2 and num_steps > 1:
            alpha *= max(0, step_i - 1) / (num_steps - 1)
        else:
            alpha *= step_i / num_steps

        xyz_det = lax.stop_gradient(xyz_world)
        pw_corr = extract_pairwise_correspondences(
            feats, xyz_det, valid, IJs, cfg["num_corr"], alpha)

        # pairwise alignment (weighted Umeyama on gathered correspondences)
        pw_Rts = {}
        for (i, j), (id_i, id_j, w_ij) in pw_corr.items():
            ci = nn_gather(xyz_cam[:, i], id_i)
            cj = nn_gather(xyz_cam[:, j], id_j)
            pw_Rts[(i, j)] = align_cpa(ci, cj, w_ij)

        pw_conf = {}
        for (i, j), (_, _, w_ij) in pw_corr.items():
            conf_ij = jnp.mean(w_ij, axis=1)
            if abs(i - j) > 1:
                conf_ij = jnp.maximum(conf_ij - cfg["confidence_min"], 0.0)
                conf_ij = conf_ij / (1.0 - cfg["confidence_min"])
            pw_conf[(i, j)] = conf_ij

        output[f"pw_conf_{step_i}"] = pw_conf
        output[f"pw_corr_{step_i}"] = {
            ij: (nn_gather(xyz_cam[:, ij[0]], c[0]),
                 nn_gather(xyz_cam[:, ij[1]], c[1]), c[2])
            for ij, c in pw_corr.items()}
        output[f"pw_Rts_{step_i}"] = pw_Rts

        if not cfg["use_gt_Rt"]:
            pw_loss = get_corr_loss(xyz_cam, pw_corr, pw_conf, cfg, pw_Rts=pw_Rts)
            output[f"pw-corr_loss_{step_i}"] = pw_loss
            pw_losses = sum(pw_loss[ij] for ij in pw_loss) / len(pw_loss)
            losses.append(cfg["w_pairwise"] * pw_losses)

        if cfg["sync_algorithm"] == "adjacent":
            abs_Rts = camera_chaining(pw_Rts, pw_conf, V, B)
        else:
            # TODO(synk): camera_synchronization ('all') not implemented; config uses 'adjacent'.
            raise ValueError("Unknown sync. algorithm: " + cfg["sync_algorithm"])
        output[f"Rts_{step_i}"] = abs_Rts

        Rts = abs_Rts
        sync_loss = get_corr_loss(xyz_cam, pw_corr, pw_conf, cfg, abs_Rts=Rts)
        output[f"sync-corr_loss_{step_i}"] = sync_loss
        sync_losses = sum(sync_loss[ij] for ij in sync_loss) / len(sync_loss)
        losses.append(cfg["w_sync"] * sync_losses)

        xyz_world = transform_points_Rt(xyz_cam, Rts, inverse=True)

    output["num_corr"] = jnp.ones((B,), dtype=K.dtype) * cfg["num_corr"]
    output["loss"] = sum(losses)                                    # (B,)
    return output


# --------------------------------- main --------------------------------------
if __name__ == "__main__":
    key = jax.random.PRNGKey(0)
    B, V, H, W = 2, CFG["num_views"], 16, 16
    Fdim, HID = CFG["feat_dim"], CFG["hidden_dim"]
    keys = jax.random.split(key, 2 * V + 2)

    rgbs = tuple(jax.random.uniform(keys[i], (B, 3, H, W), jnp.float32)
                 for i in range(V))
    deps = tuple(jax.random.uniform(keys[V + i], (B, 1, H, W), jnp.float32,
                                    minval=0.5, maxval=2.5)
                 for i in range(V))
    K = jnp.broadcast_to(
        jnp.array([[20.0, 0.0, W / 2.0],
                   [0.0, 20.0, H / 2.0],
                   [0.0, 0.0, 1.0]], jnp.float32), (B, 3, 3))

    # deterministic synthetic feature-extractor params (1x1-conv MLP: 3 -> HID -> F)
    w1 = 0.5 * jax.random.normal(keys[-2], (3, HID), jnp.float32)
    b1 = jnp.zeros((1, HID), jnp.float32)
    w2 = 0.5 * jax.random.normal(keys[-1], (HID, Fdim), jnp.float32)
    b2 = jnp.zeros((1, Fdim), jnp.float32)
    params = (w1, b1, w2, b2)

    out = syncmatch_forward(rgbs, K, deps, params, CFG)
    jax.block_until_ready(out["loss"])
    print("KERNEL_OK")
</pallas_src>

<mosaic_0001>
module attributes {stable_mosaic.version = 11 : i64} {
  func.func @_feat_kernel(%arg0: i32, %arg1: memref<192x12xbf16, #tpu.memory_space<vmem>>, %arg2: memref<12x128xbf16, #tpu.memory_space<vmem>>, %arg3: memref<1x128xf32, #tpu.memory_space<vmem>>, %arg4: memref<128x128xbf16, #tpu.memory_space<vmem>>, %arg5: memref<1x128xf32, #tpu.memory_space<vmem>>, %arg6: memref<128x128xbf16, #tpu.memory_space<vmem>>, %arg7: memref<192x128xf32, #tpu.memory_space<vmem>>) attributes {dimension_semantics = [#tpu.dimension_semantics<parallel>], iteration_bounds = array<i64: 2>, scalar_prefetch = 0 : i64, scratch_operands = 0 : i64, tpu.core_type = #tpu.core_type<tc>, window_params = [{transform_indices = @transform_0, window_bounds = array<i64: 192, 12>}, {pipeline_mode = #tpu.pipeline_mode<synchronous>, transform_indices = @transform_1, window_bounds = array<i64: 12, 128>}, {pipeline_mode = #tpu.pipeline_mode<synchronous>, transform_indices = @transform_2, window_bounds = array<i64: 1, 128>}, {pipeline_mode = #tpu.pipeline_mode<synchronous>, transform_indices = @transform_3, window_bounds = array<i64: 128, 128>}, {pipeline_mode = #tpu.pipeline_mode<synchronous>, transform_indices = @transform_4, window_bounds = array<i64: 1, 128>}, {pipeline_mode = #tpu.pipeline_mode<synchronous>, transform_indices = @transform_5, window_bounds = array<i64: 128, 128>}, {transform_indices = @transform_6, window_bounds = array<i64: 192, 128>}]} {
    %c0 = arith.constant 0 : index
    %c0_0 = arith.constant 0 : index
    %0 = vector.load %arg1[%c0, %c0_0] : memref<192x12xbf16, #tpu.memory_space<vmem>>, vector<192x12xbf16>
    %c0_1 = arith.constant 0 : index
    %c0_2 = arith.constant 0 : index
    %1 = vector.load %arg2[%c0_1, %c0_2] : memref<12x128xbf16, #tpu.memory_space<vmem>>, vector<12x128xbf16>
    %cst = arith.constant dense<0.000000e+00> : vector<192x128xf32>
    %2 = tpu.matmul %0, %1, %cst {dimension_numbers = #tpu.dot_dimension_numbers<[1], [0], [0], [1], [0, 0, 1, 1], [], []>} : vector<192x12xbf16>, vector<12x128xbf16>, vector<192x128xf32> -> vector<192x128xf32>
    %c0_3 = arith.constant 0 : index
    %c0_4 = arith.constant 0 : index
    %3 = vector.load %arg3[%c0_3, %c0_4] : memref<1x128xf32, #tpu.memory_space<vmem>>, vector<1x128xf32>
    %4 = vector.broadcast %3 : vector<1x128xf32> to vector<192x128xf32>
    %5 = arith.addf %2, %4 : vector<192x128xf32>
    %cst_5 = arith.constant 0.000000e+00 : f32
    %6 = vector.broadcast %cst_5 : f32 to vector<192x128xf32>
    %7 = arith.maximumf %5, %6 : vector<192x128xf32>
    %8 = arith.truncf %7 : vector<192x128xf32> to vector<192x128xbf16>
    %c0_6 = arith.constant 0 : index
    %c0_7 = arith.constant 0 : index
    %9 = vector.load %arg4[%c0_6, %c0_7] : memref<128x128xbf16, #tpu.memory_space<vmem>>, vector<128x128xbf16>
    %cst_8 = arith.constant dense<0.000000e+00> : vector<192x128xf32>
    %10 = tpu.matmul %8, %9, %cst_8 {dimension_numbers = #tpu.dot_dimension_numbers<[1], [0], [0], [1], [0, 0, 1, 1], [], []>} : vector<192x128xbf16>, vector<128x128xbf16>, vector<192x128xf32> -> vector<192x128xf32>
    %c0_9 = arith.constant 0 : index
    %c0_10 = arith.constant 0 : index
    %11 = vector.load %arg5[%c0_9, %c0_10] : memref<1x128xf32, #tpu.memory_space<vmem>>, vector<1x128xf32>
    %12 = vector.broadcast %11 : vector<1x128xf32> to vector<192x128xf32>
    %13 = arith.addf %10, %12 : vector<192x128xf32>
    %14 = arith.mulf %13, %13 : vector<192x128xf32>
    %15 = arith.truncf %14 : vector<192x128xf32> to vector<192x128xbf16>
    %c0_11 = arith.constant 0 : index
    %c0_12 = arith.constant 0 : index
    %16 = vector.load %arg6[%c0_11, %c0_12] : memref<128x128xbf16, #tpu.memory_space<vmem>>, vector<128x128xbf16>
    %cst_13 = arith.constant dense<0.000000e+00> : vector<192x128xf32>
    %17 = tpu.matmul %15, %16, %cst_13 {dimension_numbers = #tpu.dot_dimension_numbers<[1], [0], [0], [1], [0, 0, 1, 1], [], []>} : vector<192x128xbf16>, vector<128x128xbf16>, vector<192x128xf32> -> vector<192x128xf32>
    %cst_14 = arith.constant 9.99999993E-9 : f32
    %18 = vector.broadcast %cst_14 : f32 to vector<192x128xf32>
    %19 = arith.addf %17, %18 : vector<192x128xf32>
    %20 = math.rsqrt %19 : vector<192x128xf32>
    %21 = arith.mulf %13, %20 : vector<192x128xf32>
    %c0_15 = arith.constant 0 : index
    %c0_16 = arith.constant 0 : index
    %22 = vector.load %arg7[%c0_15, %c0_16] : memref<192x128xf32, #tpu.memory_space<vmem>>, vector<192x128xf32>
    tpu.vector_store %arg7[%c0_15, %c0_16], %21 {strides = array<i32>} : memref<192x128xf32, #tpu.memory_space<vmem>>, vector<192x128xf32>,
    return
  }
  func.func @transform_0(%arg0: i32) -> (i32, i32) {
    %c0_i32 = arith.constant 0 : i32
    %c0_i32_0 = arith.constant 0 : i32
    return %arg0, %c0_i32 : i32, i32
  }
  func.func @transform_1(%arg0: i32) -> (i32, i32) {
    %c0_i32 = arith.constant 0 : i32
    %c0_i32_0 = arith.constant 0 : i32
    %c0_i32_1 = arith.constant 0 : i32
    return %c0_i32, %c0_i32_0 : i32, i32
  }
  func.func @transform_2(%arg0: i32) -> (i32, i32) {
    %c0_i32 = arith.constant 0 : i32
    %c0_i32_0 = arith.constant 0 : i32
    %c0_i32_1 = arith.constant 0 : i32
    return %c0_i32, %c0_i32_0 : i32, i32
  }
  func.func @transform_3(%arg0: i32) -> (i32, i32) {
    %c0_i32 = arith.constant 0 : i32
    %c0_i32_0 = arith.constant 0 : i32
    %c0_i32_1 = arith.constant 0 : i32
    return %c0_i32, %c0_i32_0 : i32, i32
  }
  func.func @transform_4(%arg0: i32) -> (i32, i32) {
    %c0_i32 = arith.constant 0 : i32
    %c0_i32_0 = arith.constant 0 : i32
    %c0_i32_1 = arith.constant 0 : i32
    return %c0_i32, %c0_i32_0 : i32, i32
  }
  func.func @transform_5(%arg0: i32) -> (i32, i32) {
    %c0_i32 = arith.constant 0 : i32
    %c0_i32_0 = arith.constant 0 : i32
    %c0_i32_1 = arith.constant 0 : i32
    return %c0_i32, %c0_i32_0 : i32, i32
  }
  func.func @transform_6(%arg0: i32) -> (i32, i32) {
    %c0_i32 = arith.constant 0 : i32
    %c0_i32_0 = arith.constant 0 : i32
    return %arg0, %c0_i32 : i32, i32
  }
}

</mosaic_0001>

<llo_original>
// kernel: tpu_custom_call.1
$region0: #{tpu_custom_call.1}
  #allocation0 [shape = 'u32[]', space=smem, size = 0x4, offset = 0x4, fixed_abs, tag = 'smem constant byte address 0x4 - core index']
  #allocation1 [shape = 'u32[72,128]{1,0:T(1,128)}', space=vmem, size = 0x9000, scoped, tag = 'internal scratch']
  %s0 = inlined_call_operand.vmem [shape: bf16[384,12], index: 0, kind: input, shape index: {}]
  %s1 = inlined_call_operand.vmem [shape: bf16[12,128], index: 1, kind: input, shape index: {}]
  %s2 = inlined_call_operand.vmem [shape: f32[1,128], index: 2, kind: input, shape index: {}]
  %s3 = inlined_call_operand.vmem [shape: bf16[128,128], index: 3, kind: input, shape index: {}]
  %s4 = inlined_call_operand.vmem [shape: f32[1,128], index: 4, kind: input, shape index: {}]
  %s5 = inlined_call_operand.vmem [shape: bf16[128,128], index: 5, kind: input, shape index: {}]
  %s6 = inlined_call_operand.hbm [shape: f32[384,128], index: 6, kind: output, shape index: {}]
  %s7 = sld [smem:[#allocation0]]
  $region57: #{tpu_custom_call.1} parent=0
    _
  %s9 = ssub.s32 1, %s7
  %s10 = scalar_select 0, %s9, %s7
  $region1: #{tpu_custom_call.1} parent=0
    #allocation2 [shape = 'u8[196608]{0}', space=vmem, size = 0x30000, scoped, tag = 'output window, operand 0']
    #allocation3 [shape = 's32[2]{0}', space=sflag, size = 0x8, scoped, tag = 'scoped memory for tpu_custom_call.1']
    %11 = vsyncpa [#allocation3], 0
    %s12 = scalar_lea.sflag [#allocation3], 1
    %13 = vsyncpa %s12, 0
    loop: start=0, step=1, limit=4
    $region2: #{tpu_custom_call.1} parent=1 // loop_pre_header
      _
    $region3: #{tpu_custom_call.1} parent=1 // loop_header
      %s15 = sphi 0, %s19
      %p16 = scmp.ge.s32.totalorder %s15, 4
      %s25 = sphi 0, %s27
      %s28 = sphi 0, %s25
      %s29 = sphi 0, %s28
      %s45 = sphi 0, %s29
      %s49 = sphi 0, %s49
      %s51 = sphi 0, %s49
      %s52 = sphi 0, %s51
      %s66 = sphi 0, %s52
      %s70 = sphi 0, %s70
      %s72 = sphi 0, %s70
      %s73 = sphi 0, %s72
      %s87 = sphi 0, %s73
      %s91 = sphi 0, %s91
      %s93 = sphi 0, %s91
      %s94 = sphi 0, %s93
      %s108 = sphi 0, %s94
      %s112 = sphi 0, %s112
      %s114 = sphi 0, %s112
      %s115 = sphi 0, %s114
      %s129 = sphi 0, %s115
      %s133 = sphi 0, %s133
      %s135 = sphi 0, %s133
      %s136 = sphi 0, %s135
      %s150 = sphi 0, %s136
      %s156 = sphi 0, %s158
      %s159 = sphi 0, %s156
      %s160 = sphi 0, %s159
      %s176 = sphi 0, %s160
    $region4: #{tpu_custom_call.1} parent=1 // loop_header_branch
      %18 = sbr.rel (%p16) target = $region8
    $region5: #{tpu_custom_call.1} parent=1 // loop_body
      %s20 = ssub.s32 %s15, 1
      %s21 = ssub.s32 %s15, 2
      %s22 = sadd.s32 %s15, 1
      %s23 = ssub.s32 %s15, %s22
      %p24 = scmp.eq.s32.totalorder %s23, 0
      %s26 = sadd.s32 %s25, 1
      %s27 = scalar_select %p24, %s25, %s26
      %p30 = pneg %p24
      %p31 = scmp.eq.s32.totalorder %s15, 1
      %p32 = por %p30, %p31
      %p33 = scmp.ne.s32.totalorder %s25, %s28
      %p34 = scmp.eq.s32.totalorder %s15, 0
      %p35 = por %p33, %p34
      %p36 = scmp.ne.s32.totalorder %s25, %s28
      %p37 = scmp.eq.s32.totalorder %s20, 1
      %p38 = por %p36, %p37
      %p39 = scmp.ne.s32.totalorder %s28, %s29
      %p40 = scmp.eq.s32.totalorder %s20, 0
      %p41 = por %p39, %p40
      %p42 = scmp.ne.s32.totalorder %s28, %s29
      %p43 = scmp.eq.s32.totalorder %s21, 1
      %p44 = por %p42, %p43
      %p46 = scmp.ne.s32.totalorder %s29, %s45
      %p47 = scmp.eq.s32.totalorder %s21, 0
      %p48 = por %p46, %p47
      %s50 = sadd.s32 %s49, 1
      %p53 = scmp.eq.s32.totalorder %s15, 1
      %p54 = scmp.ne.s32.totalorder %s49, %s51
      %p55 = scmp.eq.s32.totalorder %s15, 0
      %p56 = por %p54, %p55
      %p57 = scmp.ne.s32.totalorder %s49, %s51
      %p58 = scmp.eq.s32.totalorder %s20, 1
      %p59 = por %p57, %p58
      %p60 = scmp.ne.s32.totalorder %s51, %s52
      %p61 = scmp.eq.s32.totalorder %s20, 0
      %p62 = por %p60, %p61
      %p63 = scmp.ne.s32.totalorder %s51, %s52
      %p64 = scmp.eq.s32.totalorder %s21, 1
      %p65 = por %p63, %p64
      %p67 = scmp.ne.s32.totalorder %s52, %s66
      %p68 = scmp.eq.s32.totalorder %s21, 0
      %p69 = por %p67, %p68
      %s71 = sadd.s32 %s70, 1
      %p74 = scmp.eq.s32.totalorder %s15, 1
      %p75 = scmp.ne.s32.totalorder %s70, %s72
      %p76 = scmp.eq.s32.totalorder %s15, 0
      %p77 = por %p75, %p76
      %p78 = scmp.ne.s32.totalorder %s70, %s72
      %p79 = scmp.eq.s32.totalorder %s20, 1
      %p80 = por %p78, %p79
      %p81 = scmp.ne.s32.totalorder %s72, %s73
      %p82 = scmp.eq.s32.totalorder %s20, 0
      %p83 = por %p81, %p82
      %p84 = scmp.ne.s32.totalorder %s72, %s73
      %p85 = scmp.eq.s32.totalorder %s21, 1
      %p86 = por %p84, %p85
      %p88 = scmp.ne.s32.totalorder %s73, %s87
      %p89 = scmp.eq.s32.totalorder %s21, 0
      %p90 = por %p88, %p89
      %s92 = sadd.s32 %s91, 1
      %p95 = scmp.eq.s32.totalorder %s15, 1
      %p96 = scmp.ne.s32.totalorder %s91, %s93
      %p97 = scmp.eq.s32.totalorder %s15, 0
      %p98 = por %p96, %p97
      %p99 = scmp.ne.s32.totalorder %s91, %s93
      %p100 = scmp.eq.s32.totalorder %s20, 1
      %p101 = por %p99, %p100
      %p102 = scmp.ne.s32.totalorder %s93, %s94
      %p103 = scmp.eq.s32.totalorder %s20, 0
      %p104 = por %p102, %p103
      %p105 = scmp.ne.s32.totalorder %s93, %s94
      %p106 = scmp.eq.s32.totalorder %s21, 1
      %p107 = por %p105, %p106
      %p109 = scmp.ne.s32.totalorder %s94, %s108
      %p110 = scmp.eq.s32.totalorder %s21, 0
      %p111 = por %p109, %p110
      %s113 = sadd.s32 %s112, 1
      %p116 = scmp.eq.s32.totalorder %s15, 1
      %p117 = scmp.ne.s32.totalorder %s112, %s114
      %p118 = scmp.eq.s32.totalorder %s15, 0
      %p119 = por %p117, %p118
      %p120 = scmp.ne.s32.totalorder %s112, %s114
      %p121 = scmp.eq.s32.totalorder %s20, 1
      %p122 = por %p120, %p121
      %p123 = scmp.ne.s32.totalorder %s114, %s115
      %p124 = scmp.eq.s32.totalorder %s20, 0
      %p125 = por %p123, %p124
      %p126 = scmp.ne.s32.totalorder %s114, %s115
      %p127 = scmp.eq.s32.totalorder %s21, 1
      %p128 = por %p126, %p127
      %p130 = scmp.ne.s32.totalorder %s115, %s129
      %p131 = scmp.eq.s32.totalorder %s21, 0
      %p132 = por %p130, %p131
      %s134 = sadd.s32 %s133, 1
      %p137 = scmp.eq.s32.totalorder %s15, 1
      %p138 = scmp.ne.s32.totalorder %s133, %s135
      %p139 = scmp.eq.s32.totalorder %s15, 0
      %p140 = por %p138, %p139
      %p141 = scmp.ne.s32.totalorder %s133, %s135
      %p142 = scmp.eq.s32.totalorder %s20, 1
      %p143 = por %p141, %p142
      %p144 = scmp.ne.s32.totalorder %s135, %s136
      %p145 = scmp.eq.s32.totalorder %s20, 0
      %p146 = por %p144, %p145
      %p147 = scmp.ne.s32.totalorder %s135, %s136
      %p148 = scmp.eq.s32.totalorder %s21, 1
      %p149 = por %p147, %p148
      %p151 = scmp.ne.s32.totalorder %s136, %s150
      %p152 = scmp.eq.s32.totalorder %s21, 0
      %p153 = por %p151, %p152
      %s154 = ssub.s32 %s15, %s22
      %p155 = scmp.eq.s32.totalorder %s154, 0
      %s157 = sadd.s32 %s156, 1
      %s158 = scalar_select %p155, %s156, %s157
      %p161 = pneg %p155
      %p162 = scmp.eq.s32.totalorder %s15, 1
      %p163 = por %p161, %p162
      %p164 = scmp.ne.s32.totalorder %s156, %s159
      %p165 = scmp.eq.s32.totalorder %s15, 0
      %p166 = por %p164, %p165
      %p167 = scmp.ne.s32.totalorder %s156, %s159
      %p168 = scmp.eq.s32.totalorder %s20, 1
      %p169 = por %p167, %p168
      %p170 = scmp.ne.s32.totalorder %s159, %s160
      %p171 = scmp.eq.s32.totalorder %s20, 0
      %p172 = por %p170, %p171
      %p173 = scmp.ne.s32.totalorder %s159, %s160
      %p174 = scmp.eq.s32.totalorder %s21, 1
      %p175 = por %p173, %p174
      %p177 = scmp.ne.s32.totalorder %s160, %s176
      %p178 = scmp.eq.s32.totalorder %s21, 0
      %p179 = por %p177, %p178
      %p180 = scmp.le.s32.totalorder 1, %s15
      %p181 = scmp.lt.s32.totalorder %s15, 3
      %p182 = pnand %p180, %p181
      %p183 = pneg %p182
      // Predicated region
      $region9: #{tpu_custom_call.1} parent=5 // pred_check
        _
      $region10: #{tpu_custom_call.1} parent=5 // pred_check_branch
        %185 = sbr.rel (%p182) target = $region12
      $region11: #{tpu_custom_call.1} parent=5 // pred_region
        %s186 = ssub.s32 %s15, 1
        // Predicated region
        $region13: #{tpu_custom_call.1} parent=11 // pred_check
          %p187 = pneg %p62
        $region14: #{tpu_custom_call.1} parent=11 // pred_check_branch
          %189 = sbr.rel (%p187) target = $region16
        $region15: #{tpu_custom_call.1} parent=11 // pred_region
          _
        $region16: #{tpu_custom_call.1} parent=11 // pred_fallthru
          _
        // Predicated region
        $region17: #{tpu_custom_call.1} parent=11 // pred_check
          %p190 = pneg %p83
        $region18: #{tpu_custom_call.1} parent=11 // pred_check_branch
          %192 = sbr.rel (%p190) target = $region20
        $region19: #{tpu_custom_call.1} parent=11 // pred_region
          _
        $region20: #{tpu_custom_call.1} parent=11 // pred_fallthru
          _
        // Predicated region
        $region21: #{tpu_custom_call.1} parent=11 // pred_check
          %p193 = pneg %p104
        $region22: #{tpu_custom_call.1} parent=11 // pred_check_branch
          %195 = sbr.rel (%p193) target = $region24
        $region23: #{tpu_custom_call.1} parent=11 // pred_region
          _
        $region24: #{tpu_custom_call.1} parent=11 // pred_fallthru
          _
        // Predicated region
        $region25: #{tpu_custom_call.1} parent=11 // pred_check
          %p196 = pneg %p125
        $region26: #{tpu_custom_call.1} parent=11 // pred_check_branch
          %198 = sbr.rel (%p196) target = $region28
        $region27: #{tpu_custom_call.1} parent=11 // pred_region
          _
        $region28: #{tpu_custom_call.1} parent=11 // pred_fallthru
          _
        // Predicated region
        $region29: #{tpu_custom_call.1} parent=11 // pred_check
          %p199 = pneg %p146
        $region30: #{tpu_custom_call.1} parent=11 // pred_check_branch
          %201 = sbr.rel (%p199) target = $region32
        $region31: #{tpu_custom_call.1} parent=11 // pred_region
          _
        $region32: #{tpu_custom_call.1} parent=11 // pred_fallthru
          _
      $region12: #{tpu_custom_call.1} parent=5 // pred_fallthru
        _
      %p202 = scmp.lt.s32.totalorder %s15, 2
      // Predicated region
      $region33: #{tpu_custom_call.1} parent=5 // pred_check
        %p203 = pneg %p202
      $region34: #{tpu_custom_call.1} parent=5 // pred_check_branch
        %205 = sbr.rel (%p203) target = $region36
      $region35: #{tpu_custom_call.1} parent=5 // pred_region
        // Predicated region
        $region37: #{tpu_custom_call.1} parent=35 // pred_check
          %p206 = pneg %p35
        $region38: #{tpu_custom_call.1} parent=35 // pred_check_branch
          %208 = sbr.rel (%p206) target = $region40
        $region39: #{tpu_custom_call.1} parent=35 // pred_region
          %s209 = smul.u32 24, %s15
          %p210 = scmp.lt.s32.totalorder %s209, 47
          %s211 = scalar_select %p210, %s209, 47
          %s212 = smul.addr %s211, 4
          %s213 = scalar_lea.vmem %s0, %s212
          %s214 = smul.u32 24, %s15
        $region40: #{tpu_custom_call.1} parent=35 // pred_fallthru
          _
      $region36: #{tpu_custom_call.1} parent=5 // pred_fallthru
        _
      %p215 = scmp.le.s32.totalorder 1, %s15
      %p216 = scmp.lt.s32.totalorder %s15, 3
      %p217 = pnand %p215, %p216
      %p218 = pneg %p217
      // Predicated region
      $region41: #{tpu_custom_call.1} parent=5 // pred_check
        _
      $region42: #{tpu_custom_call.1} parent=5 // pred_check_branch
        %220 = sbr.rel (%p217) target = $region44
      $region43: #{tpu_custom_call.1} parent=5 // pred_region
        %s221 = ssub.s32 %s15, 1
        %s222 = smul.u32 24, %s20
        %p223 = scmp.lt.s32.totalorder %s222, 47
        %s224 = scalar_select %p223, %s222, 47
        %s225 = smul.addr %s224, 4
        %s226 = scalar_lea.vmem %s0, %s225
        %p227 = pneg %p41
        %p228 = pneg %p38
        %p229 = pneg %p62
        %p230 = pneg %p59
        %p231 = pneg %p83
        %p232 = pneg %p80
        %p233 = pneg %p104
        %p234 = pneg %p101
        %p235 = pneg %p125
        %p236 = pneg %p122
        %p237 = pneg %p146
        %p238 = pneg %p143
        %p239 = pneg %p172
        %p240 = pneg %p169
        %s241 = sand.u32 %s159, 1
        %s242 = scalar_lea.sflag [#allocation3], %s241
        %s243 = sand.u32 %s159, 1
        %s244 = smul.addr %s243, 192
        %s245 = scalar_lea.vmem [#allocation2], %s244
        %s246 = smul.u32 24, %s20
        %p247 = scmp.lt.s32.totalorder %s246, 47
        %s248 = scalar_select %p247, %s246, 47
        %s249 = smul.addr %s248, 4
        %s250 = scalar_lea.vmem %s0, %s249
        %s251 = smul.u32 24, %s20
        %s252 = smul.u32 24, %s20
        %v254 = vld [vmem:[%s250] sm:$0xf]
        %v255 = vld [vmem:[%s250 + $0x4] sm:$0xf]
        %v256 = vld [vmem:[%s250 + $0x8] sm:$0xf]
        %v257 = vld [vmem:[%s250 + $0xc] sm:$0xf]
        %v258 = vld [vmem:[%s250 + $0x10] sm:$0xf]
        %v259 = vld [vmem:[%s250 + $0x14] sm:$0xf]
        %v260 = vld [vmem:[%s250 + $0x18] sm:$0xf]
        %v261 = vld [vmem:[%s250 + $0x1c] sm:$0xf]
        %v262 = vld [vmem:[%s250 + $0x20] sm:$0xf]
        %v263 = vld [vmem:[%s250 + $0x24] sm:$0xf]
        %v264 = vld [vmem:[%s250 + $0x28] sm:$0xf]
        %v265 = vld [vmem:[%s250 + $0x2c] sm:$0xf]
        %v266 = vld [vmem:[%s250 + $0x30] sm:$0xf]
        %v267 = vld [vmem:[%s250 + $0x34] sm:$0xf]
        %v268 = vld [vmem:[%s250 + $0x38] sm:$0xf]
        %v269 = vld [vmem:[%s250 + $0x3c] sm:$0xf]
        %v270 = vld [vmem:[%s250 + $0x40] sm:$0xf]
        %v271 = vld [vmem:[%s250 + $0x44] sm:$0xf]
        %v272 = vld [vmem:[%s250 + $0x48] sm:$0xf]
        %v273 = vld [vmem:[%s250 + $0x4c] sm:$0xf]
        %v274 = vld [vmem:[%s250 + $0x50] sm:$0xf]
        %v275 = vld [vmem:[%s250 + $0x54] sm:$0xf]
        %v276 = vld [vmem:[%s250 + $0x58] sm:$0xf]
        %v277 = vld [vmem:[%s250 + $0x5c] sm:$0xf]
        %v278 = vld [vmem:[%s1] sm:$0xf]
        %v279 = vld [vmem:[%s1 + $0x4] sm:$0x3]
        %v280 = vld [vmem:[%s2] sm:$0x1]
        %v282 = vperm.slane %v280, 0
        %v308 = vunpack.c.l.b16 %v254
        %v309 = vunpack.c.l.b16 %v255
        %v310 = vunpack.c.l.b16 %v256
        %v311 = vunpack.c.l.b16 %v257
        %v312 = vunpack.c.l.b16 %v258
        %v313 = vunpack.c.l.b16 %v259
        %v314 = vunpack.c.l.b16 %v260
        %v315 = vunpack.c.l.b16 %v261
        %v316 = vunpack.c.l.b16 %v262
        %v317 = vunpack.c.l.b16 %v263
        %v318 = vunpack.c.l.b16 %v264
        %v319 = vunpack.c.l.b16 %v265
        %v320 = vunpack.c.l.b16 %v266
        %v321 = vunpack.c.l.b16 %v267
        %v322 = vunpack.c.l.b16 %v268
        %v323 = vunpack.c.l.b16 %v269
        %v324 = vunpack.c.l.b16 %v270
        %v325 = vunpack.c.l.b16 %v271
        %v326 = vunpack.c.l.b16 %v272
        %v327 = vunpack.c.l.b16 %v273
        %v328 = vunpack.c.l.b16 %v274
        %v329 = vunpack.c.l.b16 %v275
        %v330 = vunpack.c.l.b16 %v276
        %v331 = vunpack.c.l.b16 %v277
        %v332 = vpack.c.b16 %v309, %v308
        %v333 = vpack.c.b16 %v311, %v310
        %v334 = vpack.c.b16 %v313, %v312
        %v335 = vpack.c.b16 %v315, %v314
        %v336 = vpack.c.b16 %v317, %v316
        %v337 = vpack.c.b16 %v319, %v318
        %v338 = vpack.c.b16 %v321, %v320
        %v339 = vpack.c.b16 %v323, %v322
        %v340 = vpack.c.b16 %v325, %v324
        %v341 = vpack.c.b16 %v327, %v326
        %v342 = vpack.c.b16 %v329, %v328
        %v343 = vpack.c.b16 %v331, %v330
        %v346 = vunpack.c.l.b16 %v278
        %v347 = vunpack.c.l.b16 %v279
        %v348 = vpack.c.b16 %v347, %v346
        %vm349 = vcmask 97280
        %v351 = vsel %vm349, %v332, 0
        %v354 = vsel %vm349, %v333, 0
        %v357 = vsel %vm349, %v334, 0
        %v360 = vsel %vm349, %v335, 0
        %v363 = vsel %vm349, %v336, 0
        %v366 = vsel %vm349, %v337, 0
        %v369 = vsel %vm349, %v338, 0
        %v372 = vsel %vm349, %v339, 0
        %v375 = vsel %vm349, %v340, 0
        %v378 = vsel %vm349, %v341, 0
        %v381 = vsel %vm349, %v342, 0
        %v384 = vsel %vm349, %v343, 0
        %vm386 = vcmask 1045504
        %v388 = vsel %vm386, %v348, 0
        %390 = vmatpush.bf16.msra.mxu0 0
        %391 = vmatpush.bf16.msra.mxu0 0
        %392 = vmatpush.bf16.msra.mxu0 0
        %393 = vmatpush.bf16.msra.mxu0 0
        %394 = vmatpush.bf16.msra.mxu0 0
        %395 = vmatpush.bf16.msra.mxu0 0
        %396 = vmatpush.bf16.msra.mxu0 0
        %397 = vmatpush.bf16.msra.mxu0 %v388
        %398 = vmatmul.bf16.gmra.mxu0 %v351
        %v399 = vpop.f32.mrf.mxu0
        %v400 = vadd.f32 %v282, %v399
        %v401 = vpop.f32.mrf.mxu0
        %v402 = vadd.f32 %v282, %v401
        %403 = vmatmul.bf16.gmra.mxu0 %v354
        %v404 = vpop.f32.mrf.mxu0
        %v405 = vadd.f32 %v282, %v404
        %v406 = vpop.f32.mrf.mxu0
        %v407 = vadd.f32 %v282, %v406
        %408 = vmatmul.bf16.gmra.mxu0 %v357
        %v409 = vpop.f32.mrf.mxu0
        %v410 = vadd.f32 %v282, %v409
        %v411 = vpop.f32.mrf.mxu0
        %v412 = vadd.f32 %v282, %v411
        %413 = vmatmul.bf16.gmra.mxu0 %v360
        %v414 = vpop.f32.mrf.mxu0
        %v415 = vadd.f32 %v282, %v414
        %v416 = vpop.f32.mrf.mxu0
        %v417 = vadd.f32 %v282, %v416
        %418 = vmatmul.bf16.gmra.mxu0 %v363
        %v419 = vpop.f32.mrf.mxu0
        %v420 = vadd.f32 %v282, %v419
        %v421 = vpop.f32.mrf.mxu0
        %v422 = vadd.f32 %v282, %v421
        %423 = vmatmul.bf16.gmra.mxu0 %v366
        %v424 = vpop.f32.mrf.mxu0
        %v425 = vadd.f32 %v282, %v424
        %v426 = vpop.f32.mrf.mxu0
        %v427 = vadd.f32 %v282, %v426
        %428 = vmatmul.bf16.gmra.mxu0 %v369
        %v429 = vpop.f32.mrf.mxu0
        %v430 = vadd.f32 %v282, %v429
        %v431 = vpop.f32.mrf.mxu0
        %v432 = vadd.f32 %v282, %v431
        %433 = vmatmul.bf16.gmra.mxu0 %v372
        %v434 = vpop.f32.mrf.mxu0
        %v435 = vadd.f32 %v282, %v434
        %v436 = vpop.f32.mrf.mxu0
        %v437 = vadd.f32 %v282, %v436
        %438 = vmatmul.bf16.gmra.mxu0 %v375
        %v439 = vpop.f32.mrf.mxu0
        %v440 = vadd.f32 %v282, %v439
        %v441 = vpop.f32.mrf.mxu0
        %v442 = vadd.f32 %v282, %v441
        %443 = vmatmul.bf16.gmra.mxu0 %v378
        %v444 = vpop.f32.mrf.mxu0
        %v445 = vadd.f32 %v282, %v444
        %v446 = vpop.f32.mrf.mxu0
        %v447 = vadd.f32 %v282, %v446
        %448 = vmatmul.bf16.gmra.mxu0 %v381
        %v449 = vpop.f32.mrf.mxu0
        %v450 = vadd.f32 %v282, %v449
        %v451 = vpop.f32.mrf.mxu0
        %v452 = vadd.f32 %v282, %v451
        %453 = vmatmul.bf16.gmra.mxu0 %v384
        %v454 = vpop.f32.mrf.mxu0
        %v455 = vadd.f32 %v282, %v454
        %v456 = vpop.f32.mrf.mxu0
        %v457 = vadd.f32 %v282, %v456
        %458 = vdwg.mxu0
        %v459 = vmax.f32 %v400, 0.0
        %v460 = vmax.f32 %v402, 0.0
        %v461 = vmax.f32 %v405, 0.0
        %v462 = vmax.f32 %v407, 0.0
        %v463 = vmax.f32 %v410, 0.0
        %v464 = vmax.f32 %v412, 0.0
        %v465 = vmax.f32 %v415, 0.0
        %v466 = vmax.f32 %v417, 0.0
        %v467 = vmax.f32 %v420, 0.0
        %v468 = vmax.f32 %v422, 0.0
        %v469 = vmax.f32 %v425, 0.0
        %v470 = vmax.f32 %v427, 0.0
        %v471 = vmax.f32 %v430, 0.0
        %v472 = vmax.f32 %v432, 0.0
        %v473 = vmax.f32 %v435, 0.0
        %v474 = vmax.f32 %v437, 0.0
        %v475 = vmax.f32 %v440, 0.0
        %v476 = vmax.f32 %v442, 0.0
        %v477 = vmax.f32 %v445, 0.0
        %v478 = vmax.f32 %v447, 0.0
        %v479 = vmax.f32 %v450, 0.0
        %v480 = vmax.f32 %v452, 0.0
        %v481 = vmax.f32 %v455, 0.0
        %v482 = vmax.f32 %v457, 0.0
        %v483 = vpack.c.bf16 %v460, %v459
        %v484 = vpack.c.bf16 %v462, %v461
        %v485 = vpack.c.bf16 %v464, %v463
        %v486 = vpack.c.bf16 %v466, %v465
        %v487 = vpack.c.bf16 %v468, %v467
        %v488 = vpack.c.bf16 %v470, %v469
        %v489 = vpack.c.bf16 %v472, %v471
        %v490 = vpack.c.bf16 %v474, %v473
        %v491 = vpack.c.bf16 %v476, %v475
        %v492 = vpack.c.bf16 %v478, %v477
        %v493 = vpack.c.bf16 %v480, %v479
        %v494 = vpack.c.bf16 %v482, %v481
        %v495 = vld [vmem:[%s3] sm:$0xf]
        %v496 = vld [vmem:[%s3 + $0x4] sm:$0xf]
        %v497 = vld [vmem:[%s3 + $0x8] sm:$0xf]
        %v498 = vld [vmem:[%s3 + $0xc] sm:$0xf]
        %v499 = vld [vmem:[%s3 + $0x10] sm:$0xf]
        %v500 = vld [vmem:[%s3 + $0x14] sm:$0xf]
        %v501 = vld [vmem:[%s3 + $0x18] sm:$0xf]
        %v502 = vld [vmem:[%s3 + $0x1c] sm:$0xf]
        %v503 = vld [vmem:[%s3 + $0x20] sm:$0xf]
        %v504 = vld [vmem:[%s3 + $0x24] sm:$0xf]
        %v505 = vld [vmem:[%s3 + $0x28] sm:$0xf]
        %v506 = vld [vmem:[%s3 + $0x2c] sm:$0xf]
        %v507 = vld [vmem:[%s3 + $0x30] sm:$0xf]
        %v508 = vld [vmem:[%s3 + $0x34] sm:$0xf]
        %v509 = vld [vmem:[%s3 + $0x38] sm:$0xf]
        %v510 = vld [vmem:[%s3 + $0x3c] sm:$0xf]
        %v511 = vld [vmem:[%s4] sm:$0x1]
        %v513 = vperm.slane %v511, 0
        %v531 = vunpack.c.l.b16 %v495
        %v532 = vunpack.c.l.b16 %v496
        %v533 = vunpack.c.l.b16 %v497
        %v534 = vunpack.c.l.b16 %v498
        %v535 = vunpack.c.l.b16 %v499
        %v536 = vunpack.c.l.b16 %v500
        %v537 = vunpack.c.l.b16 %v501
        %v538 = vunpack.c.l.b16 %v502
        %v539 = vunpack.c.l.b16 %v503
        %v540 = vunpack.c.l.b16 %v504
        %v541 = vunpack.c.l.b16 %v505
        %v542 = vunpack.c.l.b16 %v506
        %v543 = vunpack.c.l.b16 %v507
        %v544 = vunpack.c.l.b16 %v508
        %v545 = vunpack.c.l.b16 %v509
        %v546 = vunpack.c.l.b16 %v510
        %v547 = vpack.c.b16 %v532, %v531
        %v548 = vpack.c.b16 %v534, %v533
        %v549 = vpack.c.b16 %v536, %v535
        %v550 = vpack.c.b16 %v538, %v537
        %v551 = vpack.c.b16 %v540, %v539
        %v552 = vpack.c.b16 %v542, %v541
        %v553 = vpack.c.b16 %v544, %v543
        %v554 = vpack.c.b16 %v546, %v545
        %563 = vmatpush.bf16.msra.mxu0 %v554
        %564 = vmatpush.bf16.msra.mxu0 %v553
        %565 = vmatpush.bf16.msra.mxu0 %v552
        %566 = vmatpush.bf16.msra.mxu0 %v551
        %567 = vmatpush.bf16.msra.mxu0 %v550
        %568 = vmatpush.bf16.msra.mxu0 %v549
        %569 = vmatpush.bf16.msra.mxu0 %v548
        %570 = vmatpush.bf16.msra.mxu0 %v547
        %571 = vmatmul.bf16.gmra.mxu0 %v483
        %v572 = vpop.f32.mrf.mxu0
        %v573 = vadd.f32 %v513, %v572
        %v574 = vpop.f32.mrf.mxu0
        %v575 = vadd.f32 %v513, %v574
        %576 = vmatmul.bf16.gmra.mxu0 %v484
        %v577 = vpop.f32.mrf.mxu0
        %v578 = vadd.f32 %v513, %v577
        %v579 = vpop.f32.mrf.mxu0
        %v580 = vadd.f32 %v513, %v579
        %581 = vmatmul.bf16.gmra.mxu0 %v485
        %v582 = vpop.f32.mrf.mxu0
        %v583 = vadd.f32 %v513, %v582
        %v584 = vpop.f32.mrf.mxu0
        %v585 = vadd.f32 %v513, %v584
        %586 = vmatmul.bf16.gmra.mxu0 %v486
        %v587 = vpop.f32.mrf.mxu0
        %v588 = vadd.f32 %v513, %v587
        %v589 = vpop.f32.mrf.mxu0
        %v590 = vadd.f32 %v513, %v589
        %591 = vmatmul.bf16.gmra.mxu0 %v487
        %v592 = vpop.f32.mrf.mxu0
        %v593 = vadd.f32 %v513, %v592
        %v594 = vpop.f32.mrf.mxu0
        %v595 = vadd.f32 %v513, %v594
        %596 = vmatmul.bf16.gmra.mxu0 %v488
        %v597 = vpop.f32.mrf.mxu0
        %v598 = vadd.f32 %v513, %v597
        %v599 = vpop.f32.mrf.mxu0
        %v600 = vadd.f32 %v513, %v599
        %601 = vmatmul.bf16.gmra.mxu0 %v489
        %v602 = vpop.f32.mrf.mxu0
        %v603 = vadd.f32 %v513, %v602
        %v604 = vpop.f32.mrf.mxu0
        %v605 = vadd.f32 %v513, %v604
        %606 = vmatmul.bf16.gmra.mxu0 %v490
        %v607 = vpop.f32.mrf.mxu0
        %v608 = vadd.f32 %v513, %v607
        %v609 = vpop.f32.mrf.mxu0
        %v610 = vadd.f32 %v513, %v609
        %611 = vmatmul.bf16.gmra.mxu0 %v491
        %v612 = vpop.f32.mrf.mxu0
        %v613 = vadd.f32 %v513, %v612
        %v614 = vpop.f32.mrf.mxu0
        %v615 = vadd.f32 %v513, %v614
        %616 = vmatmul.bf16.gmra.mxu0 %v492
        %v617 = vpop.f32.mrf.mxu0
        %v618 = vadd.f32 %v513, %v617
        %v619 = vpop.f32.mrf.mxu0
        %v620 = vadd.f32 %v513, %v619
        %621 = vmatmul.bf16.gmra.mxu0 %v493
        %v622 = vpop.f32.mrf.mxu0
        %v623 = vadd.f32 %v513, %v622
        %v624 = vpop.f32.mrf.mxu0
        %v625 = vadd.f32 %v513, %v624
        %626 = vmatmul.bf16.gmra.mxu0 %v494
        %v627 = vpop.f32.mrf.mxu0
        %v628 = vadd.f32 %v513, %v627
        %v629 = vpop.f32.mrf.mxu0
        %v630 = vadd.f32 %v513, %v629
        %631 = vdwg.mxu0
        %v632 = vmul.f32 %v573, %v573
        %v633 = vmul.f32 %v575, %v575
        %v634 = vmul.f32 %v578, %v578
        %v635 = vmul.f32 %v580, %v580
        %v636 = vmul.f32 %v583, %v583
        %v637 = vmul.f32 %v585, %v585
        %v638 = vmul.f32 %v588, %v588
        %v639 = vmul.f32 %v590, %v590
        %v640 = vmul.f32 %v593, %v593
        %v641 = vmul.f32 %v595, %v595
        %v642 = vmul.f32 %v598, %v598
        %v643 = vmul.f32 %v600, %v600
        %v644 = vmul.f32 %v603, %v603
        %v645 = vmul.f32 %v605, %v605
        %v646 = vmul.f32 %v608, %v608
        %v647 = vmul.f32 %v610, %v610
        %v648 = vmul.f32 %v613, %v613
        %v649 = vmul.f32 %v615, %v615
        %v650 = vmul.f32 %v618, %v618
        %v651 = vmul.f32 %v620, %v620
        %v652 = vmul.f32 %v623, %v623
        %v653 = vmul.f32 %v625, %v625
        %v654 = vmul.f32 %v628, %v628
        %v655 = vmul.f32 %v630, %v630
        %v656 = vpack.c.bf16 %v633, %v632
        %v657 = vpack.c.bf16 %v635, %v634
        %v658 = vpack.c.bf16 %v637, %v636
        %v659 = vpack.c.bf16 %v639, %v638
        %v660 = vpack.c.bf16 %v641, %v640
        %v661 = vpack.c.bf16 %v643, %v642
        %v662 = vpack.c.bf16 %v645, %v644
        %v663 = vpack.c.bf16 %v647, %v646
        %v664 = vpack.c.bf16 %v649, %v648
        %v665 = vpack.c.bf16 %v651, %v650
        %v666 = vpack.c.bf16 %v653, %v652
        %v667 = vpack.c.bf16 %v655, %v654
        %v668 = vld [vmem:[%s5] sm:$0xf]
        %v669 = vld [vmem:[%s5 + $0x4] sm:$0xf]
        %v670 = vld [vmem:[%s5 + $0x8] sm:$0xf]
        %v671 = vld [vmem:[%s5 + $0xc] sm:$0xf]
        %v672 = vld [vmem:[%s5 + $0x10] sm:$0xf]
        %v673 = vld [vmem:[%s5 + $0x14] sm:$0xf]
        %v674 = vld [vmem:[%s5 + $0x18] sm:$0xf]
        %v675 = vld [vmem:[%s5 + $0x1c] sm:$0xf]
        %v676 = vld [vmem:[%s5 + $0x20] sm:$0xf]
        %v677 = vld [vmem:[%s5 + $0x24] sm:$0xf]
        %v678 = vld [vmem:[%s5 + $0x28] sm:$0xf]
        %v679 = vld [vmem:[%s5 + $0x2c] sm:$0xf]
        %v680 = vld [vmem:[%s5 + $0x30] sm:$0xf]
        %v681 = vld [vmem:[%s5 + $0x34] sm:$0xf]
        %v682 = vld [vmem:[%s5 + $0x38] sm:$0xf]
        %v683 = vld [vmem:[%s5 + $0x3c] sm:$0xf]
        %v700 = vunpack.c.l.b16 %v668
        %v701 = vunpack.c.l.b16 %v669
        %v702 = vunpack.c.l.b16 %v670
        %v703 = vunpack.c.l.b16 %v671
        %v704 = vunpack.c.l.b16 %v672
        %v705 = vunpack.c.l.b16 %v673
        %v706 = vunpack.c.l.b16 %v674
        %v707 = vunpack.c.l.b16 %v675
        %v708 = vunpack.c.l.b16 %v676
        %v709 = vunpack.c.l.b16 %v677
        %v710 = vunpack.c.l.b16 %v678
        %v711 = vunpack.c.l.b16 %v679
        %v712 = vunpack.c.l.b16 %v680
        %v713 = vunpack.c.l.b16 %v681
        %v714 = vunpack.c.l.b16 %v682
        %v715 = vunpack.c.l.b16 %v683
        %v716 = vpack.c.b16 %v701, %v700
        %v717 = vpack.c.b16 %v703, %v702
        %v718 = vpack.c.b16 %v705, %v704
        %v719 = vpack.c.b16 %v707, %v706
        %v720 = vpack.c.b16 %v709, %v708
        %v721 = vpack.c.b16 %v711, %v710
        %v722 = vpack.c.b16 %v713, %v712
        %v723 = vpack.c.b16 %v715, %v714
        %732 = vmatpush.bf16.msra.mxu0 %v723
        %733 = vmatpush.bf16.msra.mxu0 %v722
        %734 = vmatpush.bf16.msra.mxu0 %v721
        %735 = vmatpush.bf16.msra.mxu0 %v720
        %736 = vmatpush.bf16.msra.mxu0 %v719
        %737 = vmatpush.bf16.msra.mxu0 %v718
        %738 = vmatpush.bf16.msra.mxu0 %v717
        %739 = vmatpush.bf16.msra.mxu0 %v716
        %740 = vmatmul.bf16.gmra.mxu0 %v656
        %v741 = vpop.f32.mrf.mxu0
        %v742 = vadd.f32 1e-08, %v741
        %v743 = vpop.f32.mrf.mxu0
        %v744 = vadd.f32 1e-08, %v743
        %745 = vmatmul.bf16.gmra.mxu0 %v657
        %v746 = vpop.f32.mrf.mxu0
        %v747 = vadd.f32 1e-08, %v746
        %v748 = vpop.f32.mrf.mxu0
        %v749 = vadd.f32 1e-08, %v748
        %750 = vmatmul.bf16.gmra.mxu0 %v658
        %v751 = vpop.f32.mrf.mxu0
        %v752 = vadd.f32 1e-08, %v751
        %v753 = vpop.f32.mrf.mxu0
        %v754 = vadd.f32 1e-08, %v753
        %755 = vmatmul.bf16.gmra.mxu0 %v659
        %v756 = vpop.f32.mrf.mxu0
        %v757 = vadd.f32 1e-08, %v756
        %v758 = vpop.f32.mrf.mxu0
        %v759 = vadd.f32 1e-08, %v758
        %760 = vmatmul.bf16.gmra.mxu0 %v660
        %v761 = vpop.f32.mrf.mxu0
        %v762 = vadd.f32 1e-08, %v761
        %v763 = vpop.f32.mrf.mxu0
        %v764 = vadd.f32 1e-08, %v763
        %765 = vmatmul.bf16.gmra.mxu0 %v661
        %v766 = vpop.f32.mrf.mxu0
        %v767 = vadd.f32 1e-08, %v766
        %v768 = vpop.f32.mrf.mxu0
        %v769 = vadd.f32 1e-08, %v768
        %770 = vmatmul.bf16.gmra.mxu0 %v662
        %v771 = vpop.f32.mrf.mxu0
        %v772 = vadd.f32 1e-08, %v771
        %v773 = vpop.f32.mrf.mxu0
        %v774 = vadd.f32 1e-08, %v773
        %775 = vmatmul.bf16.gmra.mxu0 %v663
        %v776 = vpop.f32.mrf.mxu0
        %v777 = vadd.f32 1e-08, %v776
        %v778 = vpop.f32.mrf.mxu0
        %v779 = vadd.f32 1e-08, %v778
        %780 = vmatmul.bf16.gmra.mxu0 %v664
        %v781 = vpop.f32.mrf.mxu0
        %v782 = vadd.f32 1e-08, %v781
        %v783 = vpop.f32.mrf.mxu0
        %v784 = vadd.f32 1e-08, %v783
        %785 = vmatmul.bf16.gmra.mxu0 %v665
        %v786 = vpop.f32.mrf.mxu0
        %v787 = vadd.f32 1e-08, %v786
        %v788 = vpop.f32.mrf.mxu0
        %v789 = vadd.f32 1e-08, %v788
        %790 = vmatmul.bf16.gmra.mxu0 %v666
        %v791 = vpop.f32.mrf.mxu0
        %v792 = vadd.f32 1e-08, %v791
        %v793 = vpop.f32.mrf.mxu0
        %v794 = vadd.f32 1e-08, %v793
        %795 = vmatmul.bf16.gmra.mxu0 %v667
        %v796 = vpop.f32.mrf.mxu0
        %v797 = vadd.f32 1e-08, %v796
        %v798 = vpop.f32.mrf.mxu0
        %v799 = vadd.f32 1e-08, %v798
        %800 = vdwg.mxu0
        %v801 = vrsqrt.pop %v742
        %v802 = vmul.f32 %v801, %v742
        %v803 = vmul.f32 %v802, %v801
        %v804 = vmul.f32 0.5, %v803
        %v805 = vsub.f32 1.5, %v804
        %v806 = vmul.f32 %v801, %v805
        %vm807 = vweird.f32 %v742
        %vm808 = vweird.f32 %v801
        %vm809 = vmor %vm807, %vm808
        %v810 = vsel %vm809, %v801, %v806
        %v811 = vrsqrt.pop %v744
        %v812 = vmul.f32 %v811, %v744
        %v813 = vmul.f32 %v812, %v811
        %v814 = vmul.f32 0.5, %v813
        %v815 = vsub.f32 1.5, %v814
        %v816 = vmul.f32 %v811, %v815
        %vm817 = vweird.f32 %v744
        %vm818 = vweird.f32 %v811
        %vm819 = vmor %vm817, %vm818
        %v820 = vsel %vm819, %v811, %v816
        %v821 = vrsqrt.pop %v747
        %v822 = vmul.f32 %v821, %v747
        %v823 = vmul.f32 %v822, %v821
        %v824 = vmul.f32 0.5, %v823
        %v825 = vsub.f32 1.5, %v824
        %v826 = vmul.f32 %v821, %v825
        %vm827 = vweird.f32 %v747
        %vm828 = vweird.f32 %v821
        %vm829 = vmor %vm827, %vm828
        %v830 = vsel %vm829, %v821, %v826
        %v831 = vrsqrt.pop %v749
        %v832 = vmul.f32 %v831, %v749
        %v833 = vmul.f32 %v832, %v831
        %v834 = vmul.f32 0.5, %v833
        %v835 = vsub.f32 1.5, %v834
        %v836 = vmul.f32 %v831, %v835
        %vm837 = vweird.f32 %v749
        %vm838 = vweird.f32 %v831
        %vm839 = vmor %vm837, %vm838
        %v840 = vsel %vm839, %v831, %v836
        %v841 = vrsqrt.pop %v752
        %v842 = vmul.f32 %v841, %v752
        %v843 = vmul.f32 %v842, %v841
        %v844 = vmul.f32 0.5, %v843
        %v845 = vsub.f32 1.5, %v844
        %v846 = vmul.f32 %v841, %v845
        %vm847 = vweird.f32 %v752
        %vm848 = vweird.f32 %v841
        %vm849 = vmor %vm847, %vm848
        %v850 = vsel %vm849, %v841, %v846
        %v851 = vrsqrt.pop %v754
        %v852 = vmul.f32 %v851, %v754
        %v853 = vmul.f32 %v852, %v851
        %v854 = vmul.f32 0.5, %v853
        %v855 = vsub.f32 1.5, %v854
        %v856 = vmul.f32 %v851, %v855
        %vm857 = vweird.f32 %v754
        %vm858 = vweird.f32 %v851
        %vm859 = vmor %vm857, %vm858
        %v860 = vsel %vm859, %v851, %v856
        %v861 = vrsqrt.pop %v757
        %v862 = vmul.f32 %v861, %v757
        %v863 = vmul.f32 %v862, %v861
        %v864 = vmul.f32 0.5, %v863
        %v865 = vsub.f32 1.5, %v864
        %v866 = vmul.f32 %v861, %v865
        %vm867 = vweird.f32 %v757
        %vm868 = vweird.f32 %v861
        %vm869 = vmor %vm867, %vm868
        %v870 = vsel %vm869, %v861, %v866
        %v871 = vrsqrt.pop %v759
        %v872 = vmul.f32 %v871, %v759
        %v873 = vmul.f32 %v872, %v871
        %v874 = vmul.f32 0.5, %v873
        %v875 = vsub.f32 1.5, %v874
        %v876 = vmul.f32 %v871, %v875
        %vm877 = vweird.f32 %v759
        %vm878 = vweird.f32 %v871
        %vm879 = vmor %vm877, %vm878
        %v880 = vsel %vm879, %v871, %v876
        %v881 = vrsqrt.pop %v762
        %v882 = vmul.f32 %v881, %v762
        %v883 = vmul.f32 %v882, %v881
        %v884 = vmul.f32 0.5, %v883
        %v885 = vsub.f32 1.5, %v884
        %v886 = vmul.f32 %v881, %v885
        %vm887 = vweird.f32 %v762
        %vm888 = vweird.f32 %v881
        %vm889 = vmor %vm887, %vm888
        %v890 = vsel %vm889, %v881, %v886
        %v891 = vrsqrt.pop %v764
        %v892 = vmul.f32 %v891, %v764
        %v893 = vmul.f32 %v892, %v891
        %v894 = vmul.f32 0.5, %v893
        %v895 = vsub.f32 1.5, %v894
        %v896 = vmul.f32 %v891, %v895
        %vm897 = vweird.f32 %v764
        %vm898 = vweird.f32 %v891
        %vm899 = vmor %vm897, %vm898
        %v900 = vsel %vm899, %v891, %v896
        %v901 = vrsqrt.pop %v767
        %v902 = vmul.f32 %v901, %v767
        %v903 = vmul.f32 %v902, %v901
        %v904 = vmul.f32 0.5, %v903
        %v905 = vsub.f32 1.5, %v904
        %v906 = vmul.f32 %v901, %v905
        %vm907 = vweird.f32 %v767
        %vm908 = vweird.f32 %v901
        %vm909 = vmor %vm907, %vm908
        %v910 = vsel %vm909, %v901, %v906
        %v911 = vrsqrt.pop %v769
        %v912 = vmul.f32 %v911, %v769
        %v913 = vmul.f32 %v912, %v911
        %v914 = vmul.f32 0.5, %v913
        %v915 = vsub.f32 1.5, %v914
        %v916 = vmul.f32 %v911, %v915
        %vm917 = vweird.f32 %v769
        %vm918 = vweird.f32 %v911
        %vm919 = vmor %vm917, %vm918
        %v920 = vsel %vm919, %v911, %v916
        %v921 = vrsqrt.pop %v772
        %v922 = vmul.f32 %v921, %v772
        %v923 = vmul.f32 %v922, %v921
        %v924 = vmul.f32 0.5, %v923
        %v925 = vsub.f32 1.5, %v924
        %v926 = vmul.f32 %v921, %v925
        %vm927 = vweird.f32 %v772
        %vm928 = vweird.f32 %v921
        %vm929 = vmor %vm927, %vm928
        %v930 = vsel %vm929, %v921, %v926
        %v931 = vrsqrt.pop %v774
        %v932 = vmul.f32 %v931, %v774
        %v933 = vmul.f32 %v932, %v931
        %v934 = vmul.f32 0.5, %v933
        %v935 = vsub.f32 1.5, %v934
        %v936 = vmul.f32 %v931, %v935
        %vm937 = vweird.f32 %v774
        %vm938 = vweird.f32 %v931
        %vm939 = vmor %vm937, %vm938
        %v940 = vsel %vm939, %v931, %v936
        %v941 = vrsqrt.pop %v777
        %v942 = vmul.f32 %v941, %v777
        %v943 = vmul.f32 %v942, %v941
        %v944 = vmul.f32 0.5, %v943
        %v945 = vsub.f32 1.5, %v944
        %v946 = vmul.f32 %v941, %v945
        %vm947 = vweird.f32 %v777
        %vm948 = vweird.f32 %v941
        %vm949 = vmor %vm947, %vm948
        %v950 = vsel %vm949, %v941, %v946
        %v951 = vrsqrt.pop %v779
        %v952 = vmul.f32 %v951, %v779
        %v953 = vmul.f32 %v952, %v951
        %v954 = vmul.f32 0.5, %v953
        %v955 = vsub.f32 1.5, %v954
        %v956 = vmul.f32 %v951, %v955
        %vm957 = vweird.f32 %v779
        %vm958 = vweird.f32 %v951
        %vm959 = vmor %vm957, %vm958
        %v960 = vsel %vm959, %v951, %v956
        %v961 = vrsqrt.pop %v782
        %v962 = vmul.f32 %v961, %v782
        %v963 = vmul.f32 %v962, %v961
        %v964 = vmul.f32 0.5, %v963
        %v965 = vsub.f32 1.5, %v964
        %v966 = vmul.f32 %v961, %v965
        %vm967 = vweird.f32 %v782
        %vm968 = vweird.f32 %v961
        %vm969 = vmor %vm967, %vm968
        %v970 = vsel %vm969, %v961, %v966
        %v971 = vrsqrt.pop %v784
        %v972 = vmul.f32 %v971, %v784
        %v973 = vmul.f32 %v972, %v971
        %v974 = vmul.f32 0.5, %v973
        %v975 = vsub.f32 1.5, %v974
        %v976 = vmul.f32 %v971, %v975
        %vm977 = vweird.f32 %v784
        %vm978 = vweird.f32 %v971
        %vm979 = vmor %vm977, %vm978
        %v980 = vsel %vm979, %v971, %v976
        %v981 = vrsqrt.pop %v787
        %v982 = vmul.f32 %v981, %v787
        %v983 = vmul.f32 %v982, %v981
        %v984 = vmul.f32 0.5, %v983
        %v985 = vsub.f32 1.5, %v984
        %v986 = vmul.f32 %v981, %v985
        %vm987 = vweird.f32 %v787
        %vm988 = vweird.f32 %v981
        %vm989 = vmor %vm987, %vm988
        %v990 = vsel %vm989, %v981, %v986
        %v991 = vrsqrt.pop %v789
        %v992 = vmul.f32 %v991, %v789
        %v993 = vmul.f32 %v992, %v991
        %v994 = vmul.f32 0.5, %v993
        %v995 = vsub.f32 1.5, %v994
        %v996 = vmul.f32 %v991, %v995
        %vm997 = vweird.f32 %v789
        %vm998 = vweird.f32 %v991
        %vm999 = vmor %vm997, %vm998
        %v1000 = vsel %vm999, %v991, %v996
        %v1001 = vrsqrt.pop %v792
        %v1002 = vmul.f32 %v1001, %v792
        %v1003 = vmul.f32 %v1002, %v1001
        %v1004 = vmul.f32 0.5, %v1003
        %v1005 = vsub.f32 1.5, %v1004
        %v1006 = vmul.f32 %v1001, %v1005
        %vm1007 = vweird.f32 %v792
        %vm1008 = vweird.f32 %v1001
        %vm1009 = vmor %vm1007, %vm1008
        %v1010 = vsel %vm1009, %v1001, %v1006
        %v1011 = vrsqrt.pop %v794
        %v1012 = vmul.f32 %v1011, %v794
        %v1013 = vmul.f32 %v1012, %v1011
        %v1014 = vmul.f32 0.5, %v1013
        %v1015 = vsub.f32 1.5, %v1014
        %v1016 = vmul.f32 %v1011, %v1015
        %vm1017 = vweird.f32 %v794
        %vm1018 = vweird.f32 %v1011
        %vm1019 = vmor %vm1017, %vm1018
        %v1020 = vsel %vm1019, %v1011, %v1016
        %v1021 = vrsqrt.pop %v797
        %v1022 = vmul.f32 %v1021, %v797
        %v1023 = vmul.f32 %v1022, %v1021
        %v1024 = vmul.f32 0.5, %v1023
        %v1025 = vsub.f32 1.5, %v1024
        %v1026 = vmul.f32 %v1021, %v1025
        %vm1027 = vweird.f32 %v797
        %vm1028 = vweird.f32 %v1021
        %vm1029 = vmor %vm1027, %vm1028
        %v1030 = vsel %vm1029, %v1021, %v1026
        %v1031 = vrsqrt.pop %v799
        %v1032 = vmul.f32 %v1031, %v799
        %v1033 = vmul.f32 %v1032, %v1031
        %v1034 = vmul.f32 0.5, %v1033
        %v1035 = vsub.f32 1.5, %v1034
        %v1036 = vmul.f32 %v1031, %v1035
        %vm1037 = vweird.f32 %v799
        %vm1038 = vweird.f32 %v1031
        %vm1039 = vmor %vm1037, %vm1038
        %v1040 = vsel %vm1039, %v1031, %v1036
        %v1041 = vmul.f32 %v573, %v810
        %v1042 = vmul.f32 %v575, %v820
        %v1043 = vmul.f32 %v578, %v830
        %v1044 = vmul.f32 %v580, %v840
        %v1045 = vmul.f32 %v583, %v850
        %v1046 = vmul.f32 %v585, %v860
        %v1047 = vmul.f32 %v588, %v870
        %v1048 = vmul.f32 %v590, %v880
        %v1049 = vmul.f32 %v593, %v890
        %v1050 = vmul.f32 %v595, %v900
        %v1051 = vmul.f32 %v598, %v910
        %v1052 = vmul.f32 %v600, %v920
        %v1053 = vmul.f32 %v603, %v930
        %v1054 = vmul.f32 %v605, %v940
        %v1055 = vmul.f32 %v608, %v950
        %v1056 = vmul.f32 %v610, %v960
        %v1057 = vmul.f32 %v613, %v970
        %v1058 = vmul.f32 %v615, %v980
        %v1059 = vmul.f32 %v618, %v990
        %v1060 = vmul.f32 %v620, %v1000
        %v1061 = vmul.f32 %v623, %v1010
        %v1062 = vmul.f32 %v625, %v1020
        %v1063 = vmul.f32 %v628, %v1030
        %v1064 = vmul.f32 %v630, %v1040
        %1065 = vst [vmem:[%s245] sm:$0xff] %v1041
        %1066 = vst [vmem:[%s245 + $0x8] sm:$0xff] %v1042
        %1067 = vst [vmem:[%s245 + $0x10] sm:$0xff] %v1043
        %1068 = vst [vmem:[%s245 + $0x18] sm:$0xff] %v1044
        %1069 = vst [vmem:[%s245 + $0x20] sm:$0xff] %v1045
        %1070 = vst [vmem:[%s245 + $0x28] sm:$0xff] %v1046
        %1071 = vst [vmem:[%s245 + $0x30] sm:$0xff] %v1047
        %1072 = vst [vmem:[%s245 + $0x38] sm:$0xff] %v1048
        %1073 = vst [vmem:[%s245 + $0x40] sm:$0xff] %v1049
        %1074 = vst [vmem:[%s245 + $0x48] sm:$0xff] %v1050
        %1075 = vst [vmem:[%s245 + $0x50] sm:$0xff] %v1051
        %1076 = vst [vmem:[%s245 + $0x58] sm:$0xff] %v1052
        %1077 = vst [vmem:[%s245 + $0x60] sm:$0xff] %v1053
        %1078 = vst [vmem:[%s245 + $0x68] sm:$0xff] %v1054
        %1079 = vst [vmem:[%s245 + $0x70] sm:$0xff] %v1055
        %1080 = vst [vmem:[%s245 + $0x78] sm:$0xff] %v1056
        %1081 = vst [vmem:[%s245 + $0x80] sm:$0xff] %v1057
        %1082 = vst [vmem:[%s245 + $0x88] sm:$0xff] %v1058
        %1083 = vst [vmem:[%s245 + $0x90] sm:$0xff] %v1059
        %1084 = vst [vmem:[%s245 + $0x98] sm:$0xff] %v1060
        %1085 = vst [vmem:[%s245 + $0xa0] sm:$0xff] %v1061
        %1086 = vst [vmem:[%s245 + $0xa8] sm:$0xff] %v1062
        %1087 = vst [vmem:[%s245 + $0xb0] sm:$0xff] %v1063
        %1088 = vst [vmem:[%s245 + $0xb8] sm:$0xff] %v1064
        %s1089 = sand.u32 %s159, 1
        %s1090 = scalar_lea.sflag [#allocation3], %s1089
        %s1091 = sand.u32 %s159, 1
        %s1092 = smul.addr %s1091, 192
        %s1093 = scalar_lea.vmem [#allocation2], %s1092
        // Predicated region
        $region45: #{tpu_custom_call.1} parent=43 // pred_check
          %p1094 = pneg %p169
        $region46: #{tpu_custom_call.1} parent=43 // pred_check_branch
          %1096 = sbr.rel (%p1094) target = $region48
        $region47: #{tpu_custom_call.1} parent=43 // pred_region
          %s1097 = smul.u32 24, %s20
          %1099 = vsyncadd %s1090, 0
          %s1100 = smul.addr %s1097, 8
          %s1101 = scalar_lea.hbm %s6, %s1100
          %s1102 = sshll.u32 %s1093, 4
          %s1103 = int_to_ptr.vmem [resolvable:$true] %s1102
          %s1104 = sshll.u32 %s1101, 4
          %s1105 = int_to_ptr.hbm [resolvable:$true] %s1104
          %1110 = dma.vmem_to_hbm [thread:$0]  %s1103, 3072, %s1105, %s1090, 128, 128, 8
        $region48: #{tpu_custom_call.1} parent=43 // pred_fallthru
          _
      $region44: #{tpu_custom_call.1} parent=5 // pred_fallthru
        _
      %p1111 = scmp.le.s32.totalorder 2, %s15
      // Predicated region
      $region49: #{tpu_custom_call.1} parent=5 // pred_check
        %p1112 = pneg %p1111
      $region50: #{tpu_custom_call.1} parent=5 // pred_check_branch
        %1114 = sbr.rel (%p1112) target = $region52
      $region51: #{tpu_custom_call.1} parent=5 // pred_region
        %s1115 = ssub.s32 %s15, 2
        // Predicated region
        $region53: #{tpu_custom_call.1} parent=51 // pred_check
          %p1116 = pneg %p175
        $region54: #{tpu_custom_call.1} parent=51 // pred_check_branch
          %1118 = sbr.rel (%p1116) target = $region56
        $region55: #{tpu_custom_call.1} parent=51 // pred_region
          %s1119 = sand.u32 %s160, 1
          %s1120 = scalar_lea.sflag [#allocation3], %s1119
          %s1121 = sand.u32 %s160, 1
          %s1122 = smul.addr %s1121, 192
          %s1123 = scalar_lea.vmem [#allocation2], %s1122
          %1125 = dma.done %s1120, 3072
        $region56: #{tpu_custom_call.1} parent=51 // pred_fallthru
          _
      $region52: #{tpu_custom_call.1} parent=5 // pred_fallthru
        _
    $region6: #{tpu_custom_call.1} parent=1 // loop_footer
      %s19 = sadd.s32 1, %s15
    $region7: #{tpu_custom_call.1} parent=1 // loop_footer_branch
      %14 = sbr.rel target = $region3
    $region8: #{tpu_custom_call.1} parent=1 // loop_exit
      _
    %1126 = vsyncpa [#allocation3], 1
    %s1127 = scalar_lea.sflag [#allocation3], 1
    %1128 = vsyncpa %s1127, 1

</llo_original>
